<compile_context>
chip_gen: v5e
topology: v5e:2x2
jax: 0.10.0
libtpu: 0.0.40
codegen_flags: <defaults>
</compile_context>

<pallas_src>
import functools

import jax
import jax.numpy as jnp
from jax import lax
from jax.experimental import pallas as pl
from jax.experimental.pallas import tpu as pltpu
import numpy as np

_LANE = 128


def _round_up(x, m):
    return ((x + m - 1) // m) * m


def _cond_block_kernel(xw_ref, w_ref, b_ref, o_ref, patch_ref, *,
                       img_w, tp, tp_ext):
    """One (batch, pixel-tile) step: in-kernel im2col + folded 3x3 conv matmul.

    xw_ref:    (1, 1, 1, tp_ext) halo'd window of the flat zero-padded image.
    w_ref:     (Cd, 9)   folded weights  (W2 @ W1).
    b_ref:     (Cd, 1)   folded bias     (W2 @ b1 + b2).
    o_ref:     (1, Cd, tp) channel-major output block (NCHW for free).
    patch_ref: (9, tp)   VMEM scratch holding the 9 taps of this tile.
    """
    win = xw_ref[0, 0]                                # (1, tp_ext), lane-dense

    # Column index of every output pixel in this tile (for the left/right
    # zero-padding masks).  p = j*tp + lane ; col = p % W.
    lane = lax.broadcasted_iota(jnp.int32, (1, tp), 1)
    pix = pl.program_id(1) * tp + lane
    if (img_w & (img_w - 1)) == 0:                    # power-of-two width
        col = jnp.bitwise_and(pix, img_w - 1)
    else:
        # float reciprocal trick (exact for pix < 2**22); avoids vector int div
        q = jnp.floor((pix.astype(jnp.float32) + 0.5) * (1.0 / img_w))
        col = pix - q.astype(jnp.int32) * img_w
    not_left = col != 0
    not_right = col != (img_w - 1)

    # Build the 9 shifted taps from the VMEM-resident window.  The shift is a
    # static lane rotation (XLU), hidden under the output store / MXU work.
    for ky in range(3):
        for kx in range(3):
            d = ky * img_w + kx                       # static shift, 0 .. 2W+2
            t = win if d == 0 else pltpu.roll(win, tp_ext - d, 1)
            t = t[:, :tp]                             # aligned prefix slice
            if kx == 0:                               # left image border
                t = jnp.where(not_left, t, 0.0)
            elif kx == 2:                             # right image border
                t = jnp.where(not_right, t, 0.0)
            r = ky * 3 + kx
            patch_ref[r:r + 1, :] = t

    out = jnp.dot(w_ref[...], patch_ref[...],
                  preferred_element_type=jnp.float32)  # (Cd, tp) on the MXU
    o_ref[0] = (out + b_ref[...]).astype(o_ref.dtype)


def _vmem_budget():
    """(tile-selection budget, vmem_limit_bytes or None) per TPU generation."""
    try:
        kind = jax.devices()[0].device_kind.lower()
    except Exception:
        kind = ""
    if "v5" in kind or "v6" in kind:
        # 128 MiB physical VMEM: take big tiles and raise the scoped limit.
        return 40 * 2**20, 80 * 2**20
    # v7x (64 MiB physical, 32 MiB scoped default) or unknown generation:
    # stay inside the default scoped limit.
    return 20 * 2**20, None


def _pick_pixel_tile(hwp, img_w, cd, batch, budget_bytes, cap=8192):
    """Largest 128-multiple divisor of the padded pixel axis that fits VMEM."""
    halo = _round_up(2 * img_w + 2, _LANE)

    def vmem_bytes(tp):
        return (2 * cd * tp * 4                  # double-buffered output block
                + 2 * 8 * (tp + halo) * 4        # double-buffered window (1 sublane -> 8)
                + 16 * tp * 4                    # (9, tp) tap scratch (sublanes pad to 16)
                + 2 * (cd + 8) * _LANE * 4)      # folded weight + bias blocks

    best = _LANE                                 # fallback: smallest lane-dense tile
    t = _LANE
    limit = min(hwp, cap)
    while t <= limit:
        if hwp % t == 0 and vmem_bytes(t) <= budget_bytes:
            best = t
        t += _LANE
    # Keep at least 2 grid steps so both v7x TensorCores get work.
    if batch * (hwp // best) < 2 and best % (2 * _LANE) == 0:
        best //= 2
    return best


def condition_block_pallas(x_nchw, w1, b1, w2, b2, *, tp=None,
                           out_dtype=jnp.float32):
    """Forward pass of _ConditionBlock.

    x_nchw: (B, 1, H, W) f32.  w1: (256,1,3,3), b1: (256,),
    w2: (Cd,256,1,1), b2: (Cd,).  Returns (B, Cd, H, W) in out_dtype.
    """
    B, c_in, H, W = x_nchw.shape
    assert c_in == 1
    c_mid = w1.shape[0]
    cd = w2.shape[0]
    hw = H * W
    hwp = _round_up(hw, _LANE)                   # lane-dense padded pixel axis

    budget, vmem_limit = _vmem_budget()
    if tp is None:
        tp = _pick_pixel_tile(hwp, W, cd, B, budget)
    assert hwp % tp == 0 and tp % _LANE == 0
    nj = hwp // tp
    halo = _round_up(2 * W + 2, _LANE)
    tp_ext = tp + halo

    # ---- fold conv2 (1x1) into conv1 (3x3): one (Cd, 9) matrix + (Cd,) bias ----
    hi = lax.Precision.HIGHEST
    w1_r = w1.reshape(c_mid, 9).astype(jnp.float32)                 # (256, 9)
    w2_r = w2.reshape(cd, c_mid).astype(jnp.float32)                # (Cd, 256)
    w_f = jnp.dot(w2_r, w1_r, precision=hi)                         # (Cd, 9)
    b_f = (jnp.dot(w2_r, b1.astype(jnp.float32), precision=hi)
           + b2.astype(jnp.float32)).reshape(cd, 1)                 # (Cd, 1)

    # ---- halo'd flat-image windows (single small image read; no (B,9,H*W)
    #      im2col materialization in HBM) ----
    # F = [0]*(W+1) ++ x.flatten() ++ zeros, so the (ky,kx) tap of output
    # pixel p is F[p + ky*W + kx] (left/right columns masked in the kernel).
    x_flat = x_nchw.reshape(B, hw).astype(jnp.float32)
    pad_r = (nj - 1) * tp + tp_ext - hw - (W + 1)
    f_pad = jnp.pad(x_flat, ((0, 0), (W + 1, pad_r)))
    idx = (jnp.arange(nj) * tp)[:, None] + jnp.arange(tp_ext)[None, :]
    x_win = jnp.take(f_pad, idx, axis=1).reshape(B, nj, 1, tp_ext)

    kernel = functools.partial(_cond_block_kernel, img_w=W, tp=tp,
                               tp_ext=tp_ext)
    compiler_kwargs = dict(dimension_semantics=("parallel", "parallel"))
    if vmem_limit is not None:
        compiler_kwargs["vmem_limit_bytes"] = vmem_limit

    out_flat = pl.pallas_call(
        kernel,
        out_shape=jax.ShapeDtypeStruct((B, cd, hwp), out_dtype),
        grid_spec=pltpu.PrefetchScalarGridSpec(
            num_scalar_prefetch=0,
            grid=(B, nj),
            in_specs=[
                pl.BlockSpec((1, 1, 1, tp_ext), lambda b, j: (b, j, 0, 0)),
                pl.BlockSpec((cd, 9), lambda b, j: (0, 0)),   # folded weights
                pl.BlockSpec((cd, 1), lambda b, j: (0, 0)),   # folded bias
            ],
            out_specs=pl.BlockSpec((1, cd, tp), lambda b, j: (b, 0, j)),
            scratch_shapes=[pltpu.VMEM((9, tp), jnp.float32)],
        ),
        compiler_params=pltpu.CompilerParams(**compiler_kwargs),
        cost_estimate=pl.CostEstimate(
            flops=2 * B * cd * 9 * hwp,
            transcendentals=0,
            bytes_accessed=4 * (B * nj * tp_ext + cd * 10 + B * cd * hwp),
        ),
    )(x_win, w_f, b_f)

    if hwp != hw:
        out_flat = out_flat[:, :, :hw]
    # (B, Cd, H*W) -> (B, Cd, H, W): free reshape, already channel-major.
    return out_flat.reshape(B, cd, H, W)


def _reference(x_nchw, w1, b1, w2, b2):
    dn = ("NCHW", "OIHW", "NCHW")
    hi = lax.Precision.HIGHEST
    c = lax.conv_general_dilated(x_nchw, w1, (1, 1), ((1, 1), (1, 1)),
                                 dimension_numbers=dn, precision=hi)
    c = c + b1.reshape(1, -1, 1, 1)
    c = lax.conv_general_dilated(c, w2, (1, 1), "VALID",
                                 dimension_numbers=dn, precision=hi)
    c = c + b2.reshape(1, -1, 1, 1)
    return c


def _init_params(key, condition_dim, c_mid=256):
    k_w1, k_b1, k_w2, k_b2 = jax.random.split(key, 4)
    lim1 = 1.0 / np.sqrt(1 * 3 * 3)
    w1 = jax.random.uniform(k_w1, (c_mid, 1, 3, 3), jnp.float32, -lim1, lim1)
    b1 = jax.random.uniform(k_b1, (c_mid,), jnp.float32, -lim1, lim1)
    lim2 = 1.0 / np.sqrt(c_mid)
    w2 = jax.random.uniform(k_w2, (condition_dim, c_mid, 1, 1), jnp.float32,
                            -lim2, lim2)
    b2 = jax.random.uniform(k_b2, (condition_dim,), jnp.float32, -lim2, lim2)
    return w1, b1, w2, b2


if __name__ == "__main__":
    key = jax.random.PRNGKey(0)
    k0, k1, k2, k3 = jax.random.split(key, 4)

    # Case 1: lane-aligned pixel count (B=2, H=W=16, condition_dim=128).
    B, H, W, cd = 2, 16, 16, 128
    x = jax.random.normal(k0, (B, 1, H, W), dtype=jnp.float32)
    params = _init_params(k1, cd)
    out = jax.block_until_ready(condition_block_pallas(x, *params))
    ref = jax.block_until_ready(_reference(x, *params))
    assert out.shape == (B, cd, H, W), out.shape
    np.testing.assert_allclose(np.asarray(out), np.asarray(ref),
                               rtol=1e-4, atol=1e-4)

    # Case 2: non-power-of-two width, unaligned H*W (exercises the padded
    # pixel axis and the border masks): B=2, H=12, W=10, condition_dim=64.
    B2, H2, W2, cd2 = 2, 12, 10, 64
    x2 = jax.random.normal(k2, (B2, 1, H2, W2), dtype=jnp.float32)
    params2 = _init_params(k3, cd2)
    out2 = jax.block_until_ready(condition_block_pallas(x2, *params2))
    ref2 = jax.block_until_ready(_reference(x2, *params2))
    assert out2.shape == (B2, cd2, H2, W2), out2.shape
    np.testing.assert_allclose(np.asarray(out2), np.asarray(ref2),
                               rtol=1e-4, atol=1e-4)

    print("KERNEL_OK")
</pallas_src>

<mosaic_0001>
module attributes {stable_mosaic.version = 11 : i64} {
  func.func @_cond_block_kernel(%arg0: i32, %arg1: i32, %arg2: memref<1x1x1x384xf32, #tpu.memory_space<vmem>>, %arg3: memref<128x9xf32, #tpu.memory_space<vmem>>, %arg4: memref<128x1xf32, #tpu.memory_space<vmem>>, %arg5: memref<1x128x256xf32, #tpu.memory_space<vmem>>, %arg6: memref<9x256xf32, #tpu.memory_space<vmem>>) attributes {dimension_semantics = [#tpu.dimension_semantics<parallel>, #tpu.dimension_semantics<parallel>], iteration_bounds = array<i64: 2, 1>, scalar_prefetch = 0 : i64, scratch_operands = 1 : i64, tpu.core_type = #tpu.core_type<tc>, window_params = [{transform_indices = @transform_0, window_bounds = array<i64: 1, 1, 1, 384>}, {pipeline_mode = #tpu.pipeline_mode<synchronous>, transform_indices = @transform_1, window_bounds = array<i64: 128, 9>}, {pipeline_mode = #tpu.pipeline_mode<synchronous>, transform_indices = @transform_2, window_bounds = array<i64: 128, 1>}, {transform_indices = @transform_3, window_bounds = array<i64: 1, 128, 256>}]} {
    %c0 = arith.constant 0 : index
    %c0_0 = arith.constant 0 : index
    %c0_1 = arith.constant 0 : index
    %c0_2 = arith.constant 0 : index
    %0 = vector.load %arg2[%c0, %c0_0, %c0_1, %c0_2] : memref<1x1x1x384xf32, #tpu.memory_space<vmem>>, vector<1x1x1x384xf32>
    %1 = vector.shape_cast %0 : vector<1x1x1x384xf32> to vector<1x384xf32>
    %2 = tpu.iota {dimensions = array<i32: 1>} : vector<1x256xi32>
    %c256_i32 = arith.constant 256 : i32
    %3 = arith.muli %arg1, %c256_i32 : i32
    %4 = vector.broadcast %3 : i32 to vector<1x256xi32>
    %5 = arith.addi %4, %2 : vector<1x256xi32>
    %c15_i32 = arith.constant 15 : i32
    %6 = vector.broadcast %c15_i32 : i32 to vector<1x256xi32>
    %7 = arith.andi %5, %6 : vector<1x256xi32>
    %c0_i32 = arith.constant 0 : i32
    %8 = vector.broadcast %c0_i32 : i32 to vector<1x256xi32>
    %9 = arith.cmpi ne, %7, %8 : vector<1x256xi32>
    %c15_i32_3 = arith.constant 15 : i32
    %10 = vector.broadcast %c15_i32_3 : i32 to vector<1x256xi32>
    %11 = arith.cmpi ne, %7, %10 : vector<1x256xi32>
    %12 = vector.extract_strided_slice %1 {offsets = [0, 0], sizes = [1, 256], strides = [1, 1]} : vector<1x384xf32> to vector<1x256xf32>
    %cst = arith.constant 0.000000e+00 : f32
    %13 = vector.broadcast %cst : f32 to vector<1x256xf32>
    %14 = arith.select %9, %12, %13 : vector<1x256xi1>, vector<1x256xf32>
    %c0_4 = arith.constant 0 : index
    %c0_5 = arith.constant 0 : index
    %15 = vector.load %arg6[%c0_4, %c0_5] : memref<9x256xf32, #tpu.memory_space<vmem>>, vector<1x256xf32>
    tpu.vector_store %arg6[%c0_4, %c0_5], %14 {strides = array<i32>} : memref<9x256xf32, #tpu.memory_space<vmem>>, vector<1x256xf32>,
    %c383_i32 = arith.constant 383 : i32
    %16 = tpu.dynamic_rotate %1 by %c383_i32 dim 1 : vector<1x384xf32>, i32 -> vector<1x384xf32>
    %17 = vector.extract_strided_slice %16 {offsets = [0, 0], sizes = [1, 256], strides = [1, 1]} : vector<1x384xf32> to vector<1x256xf32>
    %c1 = arith.constant 1 : index
    %c0_6 = arith.constant 0 : index
    %18 = vector.load %arg6[%c1, %c0_6] : memref<9x256xf32, #tpu.memory_space<vmem>>, vector<1x256xf32>
    tpu.vector_store %arg6[%c1, %c0_6], %17 {strides = array<i32>} : memref<9x256xf32, #tpu.memory_space<vmem>>, vector<1x256xf32>,
    %c382_i32 = arith.constant 382 : i32
    %19 = tpu.dynamic_rotate %1 by %c382_i32 dim 1 : vector<1x384xf32>, i32 -> vector<1x384xf32>
    %20 = vector.extract_strided_slice %19 {offsets = [0, 0], sizes = [1, 256], strides = [1, 1]} : vector<1x384xf32> to vector<1x256xf32>
    %cst_7 = arith.constant 0.000000e+00 : f32
    %21 = vector.broadcast %cst_7 : f32 to vector<1x256xf32>
    %22 = arith.select %11, %20, %21 : vector<1x256xi1>, vector<1x256xf32>
    %c2 = arith.constant 2 : index
    %c0_8 = arith.constant 0 : index
    %23 = vector.load %arg6[%c2, %c0_8] : memref<9x256xf32, #tpu.memory_space<vmem>>, vector<1x256xf32>
    tpu.vector_store %arg6[%c2, %c0_8], %22 {strides = array<i32>} : memref<9x256xf32, #tpu.memory_space<vmem>>, vector<1x256xf32>,
    %c368_i32 = arith.constant 368 : i32
    %24 = tpu.dynamic_rotate %1 by %c368_i32 dim 1 : vector<1x384xf32>, i32 -> vector<1x384xf32>
    %25 = vector.extract_strided_slice %24 {offsets = [0, 0], sizes = [1, 256], strides = [1, 1]} : vector<1x384xf32> to vector<1x256xf32>
    %cst_9 = arith.constant 0.000000e+00 : f32
    %26 = vector.broadcast %cst_9 : f32 to vector<1x256xf32>
    %27 = arith.select %9, %25, %26 : vector<1x256xi1>, vector<1x256xf32>
    %c3 = arith.constant 3 : index
    %c0_10 = arith.constant 0 : index
    %28 = vector.load %arg6[%c3, %c0_10] : memref<9x256xf32, #tpu.memory_space<vmem>>, vector<1x256xf32>
    tpu.vector_store %arg6[%c3, %c0_10], %27 {strides = array<i32>} : memref<9x256xf32, #tpu.memory_space<vmem>>, vector<1x256xf32>,
    %c367_i32 = arith.constant 367 : i32
    %29 = tpu.dynamic_rotate %1 by %c367_i32 dim 1 : vector<1x384xf32>, i32 -> vector<1x384xf32>
    %30 = vector.extract_strided_slice %29 {offsets = [0, 0], sizes = [1, 256], strides = [1, 1]} : vector<1x384xf32> to vector<1x256xf32>
    %c4 = arith.constant 4 : index
    %c0_11 = arith.constant 0 : index
    %31 = vector.load %arg6[%c4, %c0_11] : memref<9x256xf32, #tpu.memory_space<vmem>>, vector<1x256xf32>
    tpu.vector_store %arg6[%c4, %c0_11], %30 {strides = array<i32>} : memref<9x256xf32, #tpu.memory_space<vmem>>, vector<1x256xf32>,
    %c366_i32 = arith.constant 366 : i32
    %32 = tpu.dynamic_rotate %1 by %c366_i32 dim 1 : vector<1x384xf32>, i32 -> vector<1x384xf32>
    %33 = vector.extract_strided_slice %32 {offsets = [0, 0], sizes = [1, 256], strides = [1, 1]} : vector<1x384xf32> to vector<1x256xf32>
    %cst_12 = arith.constant 0.000000e+00 : f32
    %34 = vector.broadcast %cst_12 : f32 to vector<1x256xf32>
    %35 = arith.select %11, %33, %34 : vector<1x256xi1>, vector<1x256xf32>
    %c5 = arith.constant 5 : index
    %c0_13 = arith.constant 0 : index
    %36 = vector.load %arg6[%c5, %c0_13] : memref<9x256xf32, #tpu.memory_space<vmem>>, vector<1x256xf32>
    tpu.vector_store %arg6[%c5, %c0_13], %35 {strides = array<i32>} : memref<9x256xf32, #tpu.memory_space<vmem>>, vector<1x256xf32>,
    %c352_i32 = arith.constant 352 : i32
    %37 = tpu.dynamic_rotate %1 by %c352_i32 dim 1 : vector<1x384xf32>, i32 -> vector<1x384xf32>
    %38 = vector.extract_strided_slice %37 {offsets = [0, 0], sizes = [1, 256], strides = [1, 1]} : vector<1x384xf32> to vector<1x256xf32>
    %cst_14 = arith.constant 0.000000e+00 : f32
    %39 = vector.broadcast %cst_14 : f32 to vector<1x256xf32>
    %40 = arith.select %9, %38, %39 : vector<1x256xi1>, vector<1x256xf32>
    %c6 = arith.constant 6 : index
    %c0_15 = arith.constant 0 : index
    %41 = vector.load %arg6[%c6, %c0_15] : memref<9x256xf32, #tpu.memory_space<vmem>>, vector<1x256xf32>
    tpu.vector_store %arg6[%c6, %c0_15], %40 {strides = array<i32>} : memref<9x256xf32, #tpu.memory_space<vmem>>, vector<1x256xf32>,
    %c351_i32 = arith.constant 351 : i32
    %42 = tpu.dynamic_rotate %1 by %c351_i32 dim 1 : vector<1x384xf32>, i32 -> vector<1x384xf32>
    %43 = vector.extract_strided_slice %42 {offsets = [0, 0], sizes = [1, 256], strides = [1, 1]} : vector<1x384xf32> to vector<1x256xf32>
    %c7 = arith.constant 7 : index
    %c0_16 = arith.constant 0 : index
    %44 = vector.load %arg6[%c7, %c0_16] : memref<9x256xf32, #tpu.memory_space<vmem>>, vector<1x256xf32>
    tpu.vector_store %arg6[%c7, %c0_16], %43 {strides = array<i32>} : memref<9x256xf32, #tpu.memory_space<vmem>>, vector<1x256xf32>,
    %c350_i32 = arith.constant 350 : i32
    %45 = tpu.dynamic_rotate %1 by %c350_i32 dim 1 : vector<1x384xf32>, i32 -> vector<1x384xf32>
    %46 = vector.extract_strided_slice %45 {offsets = [0, 0], sizes = [1, 256], strides = [1, 1]} : vector<1x384xf32> to vector<1x256xf32>
    %cst_17 = arith.constant 0.000000e+00 : f32
    %47 = vector.broadcast %cst_17 : f32 to vector<1x256xf32>
    %48 = arith.select %11, %46, %47 : vector<1x256xi1>, vector<1x256xf32>
    %c8 = arith.constant 8 : index
    %c0_18 = arith.constant 0 : index
    %49 = vector.load %arg6[%c8, %c0_18] : memref<9x256xf32, #tpu.memory_space<vmem>>, vector<1x256xf32>
    tpu.vector_store %arg6[%c8, %c0_18], %48 {strides = array<i32>} : memref<9x256xf32, #tpu.memory_space<vmem>>, vector<1x256xf32>,
    %c0_19 = arith.constant 0 : index
    %c0_20 = arith.constant 0 : index
    %50 = vector.load %arg3[%c0_19, %c0_20] : memref<128x9xf32, #tpu.memory_space<vmem>>, vector<128x9xf32>
    %c0_21 = arith.constant 0 : index
    %c0_22 = arith.constant 0 : index
    %51 = vector.load %arg6[%c0_21, %c0_22] : memref<9x256xf32, #tpu.memory_space<vmem>>, vector<9x256xf32>
    %cst_23 = arith.constant dense<0.000000e+00> : vector<128x256xf32>
    %52 = tpu.matmul %50, %51, %cst_23 {dimension_numbers = #tpu.dot_dimension_numbers<[1], [0], [0], [1], [0, 0, 1, 1], [], []>} : vector<128x9xf32>, vector<9x256xf32>, vector<128x256xf32> -> vector<128x256xf32>
    %c0_24 = arith.constant 0 : index
    %c0_25 = arith.constant 0 : index
    %53 = vector.load %arg4[%c0_24, %c0_25] : memref<128x1xf32, #tpu.memory_space<vmem>>, vector<128x1xf32>
    %54 = vector.broadcast %53 : vector<128x1xf32> to vector<128x256xf32>
    %55 = arith.addf %52, %54 : vector<128x256xf32>
    %c0_26 = arith.constant 0 : index
    %c0_27 = arith.constant 0 : index
    %c0_28 = arith.constant 0 : index
    %56 = vector.load %arg5[%c0_26, %c0_27, %c0_28] : memref<1x128x256xf32, #tpu.memory_space<vmem>>, vector<1x128x256xf32>
    %57 = vector.shape_cast %56 : vector<1x128x256xf32> to vector<128x256xf32>
    %58 = vector.shape_cast %55 : vector<128x256xf32> to vector<1x128x256xf32>
    tpu.vector_store %arg5[%c0_26, %c0_27, %c0_28], %58 {strides = array<i32>} : memref<1x128x256xf32, #tpu.memory_space<vmem>>, vector<1x128x256xf32>,
    return
  }
  func.func @transform_0(%arg0: i32, %arg1: i32) -> (i32, i32, i32, i32) {
    %c0_i32 = arith.constant 0 : i32
    %c0_i32_0 = arith.constant 0 : i32
    %c0_i32_1 = arith.constant 0 : i32
    return %arg0, %arg1, %c0_i32, %c0_i32_0 : i32, i32, i32, i32
  }
  func.func @transform_1(%arg0: i32, %arg1: i32) -> (i32, i32) {
    %c0_i32 = arith.constant 0 : i32
    %c0_i32_0 = arith.constant 0 : i32
    %c0_i32_1 = arith.constant 0 : i32
    return %c0_i32, %c0_i32_0 : i32, i32
  }
  func.func @transform_2(%arg0: i32, %arg1: i32) -> (i32, i32) {
    %c0_i32 = arith.constant 0 : i32
    %c0_i32_0 = arith.constant 0 : i32
    %c0_i32_1 = arith.constant 0 : i32
    return %c0_i32, %c0_i32_0 : i32, i32
  }
  func.func @transform_3(%arg0: i32, %arg1: i32) -> (i32, i32, i32) {
    %c0_i32 = arith.constant 0 : i32
    %c0_i32_0 = arith.constant 0 : i32
    return %arg0, %c0_i32, %arg1 : i32, i32, i32
  }
}

</mosaic_0001>

<llo_original>
// kernel: tpu_custom_call.1
$region0: #{tpu_custom_call.1}
  #allocation0 [shape = 'u32[]', space=smem, size = 0x4, offset = 0x4, fixed_abs, tag = 'smem constant byte address 0x4 - core index']
  #allocation1 [shape = 'u32[72,128]{1,0:T(1,128)}', space=vmem, size = 0x9000, scoped, tag = 'internal scratch']
  #allocation2 [shape = 'f32[9,256]{1,0:T(8,128)}', space=vmem, size = 0x4000, scoped, tag = 'scratch operand']
  %s0 = inlined_call_operand.vmem [shape: f32[2,1,1,384], index: 0, kind: input, shape index: {}]
  %s1 = inlined_call_operand.vmem [shape: f32[128,9], index: 1, kind: input, shape index: {}]
  %s2 = inlined_call_operand.vmem [shape: f32[128,1], index: 2, kind: input, shape index: {}]
  %s3 = inlined_call_operand.hbm [shape: f32[2,128,256], index: 3, kind: output, shape index: {}]
  %s4 = sld [smem:[#allocation0]]
  $region45: #{tpu_custom_call.1} parent=0
    _
  %s6 = ssub.s32 1, %s4
  %s7 = scalar_select 0, %s6, %s4
  $region1: #{tpu_custom_call.1} parent=0
    #allocation3 [shape = 'u8[262144]{0}', space=vmem, size = 0x40000, scoped, tag = 'output window, operand 0']
    #allocation4 [shape = 's32[2]{0}', space=sflag, size = 0x8, scoped, tag = 'scoped memory for tpu_custom_call.1']
    %8 = vsyncpa [#allocation4], 0
    %s9 = scalar_lea.sflag [#allocation4], 1
    %10 = vsyncpa %s9, 0
    loop: start=0, step=1, limit=4
    $region2: #{tpu_custom_call.1} parent=1 // loop_pre_header
      _
    $region3: #{tpu_custom_call.1} parent=1 // loop_header
      %s12 = sphi 0, %s16
      %p13 = scmp.ge.s32.totalorder %s12, 4
      %s19 = sphi 0, %s31
      %s20 = sphi 0, %s27
      %s21 = sphi 0, %s19
      %s22 = sphi 0, %s20
      %s23 = sphi 0, %s21
      %s24 = sphi 0, %s22
      %s36 = sphi 0, %s38
      %s39 = sphi 0, %s36
      %s40 = sphi 0, %s39
      %s56 = sphi 0, %s40
      %s60 = sphi 0, %s60
      %s62 = sphi 0, %s60
      %s63 = sphi 0, %s62
      %s77 = sphi 0, %s63
      %s81 = sphi 0, %s81
      %s83 = sphi 0, %s81
      %s84 = sphi 0, %s83
      %s98 = sphi 0, %s84
      %s106 = sphi 0, %s108
      %s109 = sphi 0, %s106
      %s110 = sphi 0, %s109
      %s126 = sphi 0, %s110
    $region4: #{tpu_custom_call.1} parent=1 // loop_header_branch
      %15 = sbr.rel (%p13) target = $region8
    $region5: #{tpu_custom_call.1} parent=1 // loop_body
      %s17 = ssub.s32 %s12, 1
      %s18 = ssub.s32 %s12, 2
      %s25 = sadd.s32 1, %s20
      %p26 = scmp.ge.s32.totalorder %s25, 1
      %s27 = scalar_select %p26, 0, %s25
      %s28 = sadd.s32 1, %s19
      %s29 = scalar_select %p26, %s28, %s19
      %p30 = scmp.ge.s32.totalorder %s29, 2
      %s31 = scalar_select %p30, 0, %s29
      %s32 = ssub.s32 %s19, %s31
      %s33 = ssub.s32 %s20, %s27
      %s34 = sor.u32 %s32, %s33
      %p35 = scmp.eq.s32.totalorder %s34, 0
      %s37 = sadd.s32 %s36, 1
      %s38 = scalar_select %p35, %s36, %s37
      %p41 = pneg %p35
      %p42 = scmp.eq.s32.totalorder %s12, 1
      %p43 = por %p41, %p42
      %p44 = scmp.ne.s32.totalorder %s36, %s39
      %p45 = scmp.eq.s32.totalorder %s12, 0
      %p46 = por %p44, %p45
      %p47 = scmp.ne.s32.totalorder %s36, %s39
      %p48 = scmp.eq.s32.totalorder %s17, 1
      %p49 = por %p47, %p48
      %p50 = scmp.ne.s32.totalorder %s39, %s40
      %p51 = scmp.eq.s32.totalorder %s17, 0
      %p52 = por %p50, %p51
      %p53 = scmp.ne.s32.totalorder %s39, %s40
      %p54 = scmp.eq.s32.totalorder %s18, 1
      %p55 = por %p53, %p54
      %p57 = scmp.ne.s32.totalorder %s40, %s56
      %p58 = scmp.eq.s32.totalorder %s18, 0
      %p59 = por %p57, %p58
      %s61 = sadd.s32 %s60, 1
      %p64 = scmp.eq.s32.totalorder %s12, 1
      %p65 = scmp.ne.s32.totalorder %s60, %s62
      %p66 = scmp.eq.s32.totalorder %s12, 0
      %p67 = por %p65, %p66
      %p68 = scmp.ne.s32.totalorder %s60, %s62
      %p69 = scmp.eq.s32.totalorder %s17, 1
      %p70 = por %p68, %p69
      %p71 = scmp.ne.s32.totalorder %s62, %s63
      %p72 = scmp.eq.s32.totalorder %s17, 0
      %p73 = por %p71, %p72
      %p74 = scmp.ne.s32.totalorder %s62, %s63
      %p75 = scmp.eq.s32.totalorder %s18, 1
      %p76 = por %p74, %p75
      %p78 = scmp.ne.s32.totalorder %s63, %s77
      %p79 = scmp.eq.s32.totalorder %s18, 0
      %p80 = por %p78, %p79
      %s82 = sadd.s32 %s81, 1
      %p85 = scmp.eq.s32.totalorder %s12, 1
      %p86 = scmp.ne.s32.totalorder %s81, %s83
      %p87 = scmp.eq.s32.totalorder %s12, 0
      %p88 = por %p86, %p87
      %p89 = scmp.ne.s32.totalorder %s81, %s83
      %p90 = scmp.eq.s32.totalorder %s17, 1
      %p91 = por %p89, %p90
      %p92 = scmp.ne.s32.totalorder %s83, %s84
      %p93 = scmp.eq.s32.totalorder %s17, 0
      %p94 = por %p92, %p93
      %p95 = scmp.ne.s32.totalorder %s83, %s84
      %p96 = scmp.eq.s32.totalorder %s18, 1
      %p97 = por %p95, %p96
      %p99 = scmp.ne.s32.totalorder %s84, %s98
      %p100 = scmp.eq.s32.totalorder %s18, 0
      %p101 = por %p99, %p100
      %s102 = ssub.s32 %s19, %s31
      %s103 = ssub.s32 %s20, %s27
      %s104 = sor.u32 %s102, %s103
      %p105 = scmp.eq.s32.totalorder %s104, 0
      %s107 = sadd.s32 %s106, 1
      %s108 = scalar_select %p105, %s106, %s107
      %p111 = pneg %p105
      %p112 = scmp.eq.s32.totalorder %s12, 1
      %p113 = por %p111, %p112
      %p114 = scmp.ne.s32.totalorder %s106, %s109
      %p115 = scmp.eq.s32.totalorder %s12, 0
      %p116 = por %p114, %p115
      %p117 = scmp.ne.s32.totalorder %s106, %s109
      %p118 = scmp.eq.s32.totalorder %s17, 1
      %p119 = por %p117, %p118
      %p120 = scmp.ne.s32.totalorder %s109, %s110
      %p121 = scmp.eq.s32.totalorder %s17, 0
      %p122 = por %p120, %p121
      %p123 = scmp.ne.s32.totalorder %s109, %s110
      %p124 = scmp.eq.s32.totalorder %s18, 1
      %p125 = por %p123, %p124
      %p127 = scmp.ne.s32.totalorder %s110, %s126
      %p128 = scmp.eq.s32.totalorder %s18, 0
      %p129 = por %p127, %p128
      %p130 = scmp.le.s32.totalorder 1, %s12
      %p131 = scmp.lt.s32.totalorder %s12, 3
      %p132 = pnand %p130, %p131
      %p133 = pneg %p132
      // Predicated region
      $region9: #{tpu_custom_call.1} parent=5 // pred_check
        _
      $region10: #{tpu_custom_call.1} parent=5 // pred_check_branch
        %135 = sbr.rel (%p132) target = $region12
      $region11: #{tpu_custom_call.1} parent=5 // pred_region
        %s136 = ssub.s32 %s12, 1
        // Predicated region
        $region13: #{tpu_custom_call.1} parent=11 // pred_check
          %p137 = pneg %p73
        $region14: #{tpu_custom_call.1} parent=11 // pred_check_branch
          %139 = sbr.rel (%p137) target = $region16
        $region15: #{tpu_custom_call.1} parent=11 // pred_region
          _
        $region16: #{tpu_custom_call.1} parent=11 // pred_fallthru
          _
        // Predicated region
        $region17: #{tpu_custom_call.1} parent=11 // pred_check
          %p140 = pneg %p94
        $region18: #{tpu_custom_call.1} parent=11 // pred_check_branch
          %142 = sbr.rel (%p140) target = $region20
        $region19: #{tpu_custom_call.1} parent=11 // pred_region
          _
        $region20: #{tpu_custom_call.1} parent=11 // pred_fallthru
          _
      $region12: #{tpu_custom_call.1} parent=5 // pred_fallthru
        _
      %p143 = scmp.lt.s32.totalorder %s12, 2
      // Predicated region
      $region21: #{tpu_custom_call.1} parent=5 // pred_check
        %p144 = pneg %p143
      $region22: #{tpu_custom_call.1} parent=5 // pred_check_branch
        %146 = sbr.rel (%p144) target = $region24
      $region23: #{tpu_custom_call.1} parent=5 // pred_region
        // Predicated region
        $region25: #{tpu_custom_call.1} parent=23 // pred_check
          %p147 = pneg %p46
        $region26: #{tpu_custom_call.1} parent=23 // pred_check_branch
          %149 = sbr.rel (%p147) target = $region28
        $region27: #{tpu_custom_call.1} parent=23 // pred_region
          %p150 = scmp.lt.s32.totalorder %s19, 1
          %s151 = scalar_select %p150, %s19, 1
          %p152 = scmp.lt.s32.totalorder %s20, 0
          %s153 = scalar_select %p152, %s20, 0
          %s154 = smul.addr %s153, 3
          %s155 = smul.addr %s151, 3
          %s156 = sadd.s32 %s154, %s155
          %s157 = scalar_lea.vmem %s0, %s156
        $region28: #{tpu_custom_call.1} parent=23 // pred_fallthru
          _
      $region24: #{tpu_custom_call.1} parent=5 // pred_fallthru
        _
      %p158 = scmp.le.s32.totalorder 1, %s12
      %p159 = scmp.lt.s32.totalorder %s12, 3
      %p160 = pnand %p158, %p159
      %p161 = pneg %p160
      // Predicated region
      $region29: #{tpu_custom_call.1} parent=5 // pred_check
        _
      $region30: #{tpu_custom_call.1} parent=5 // pred_check_branch
        %163 = sbr.rel (%p160) target = $region32
      $region31: #{tpu_custom_call.1} parent=5 // pred_region
        %s164 = ssub.s32 %s12, 1
        %p165 = scmp.lt.s32.totalorder %s21, 1
        %s166 = scalar_select %p165, %s21, 1
        %p167 = scmp.lt.s32.totalorder %s22, 0
        %s168 = scalar_select %p167, %s22, 0
        %s169 = smul.addr %s168, 3
        %s170 = smul.addr %s166, 3
        %s171 = sadd.s32 %s169, %s170
        %s172 = scalar_lea.vmem %s0, %s171
        %p173 = pneg %p52
        %p174 = pneg %p49
        %p175 = pneg %p73
        %p176 = pneg %p70
        %p177 = pneg %p94
        %p178 = pneg %p91
        %p179 = pneg %p122
        %p180 = pneg %p119
        %s181 = sand.u32 %s109, 1
        %s182 = scalar_lea.sflag [#allocation4], %s181
        %s183 = sand.u32 %s109, 1
        %s184 = smul.addr %s183, 256
        %s185 = scalar_lea.vmem [#allocation3], %s184
        %p186 = scmp.lt.s32.totalorder %s21, 1
        %s187 = scalar_select %p186, %s21, 1
        %p188 = scmp.lt.s32.totalorder %s22, 0
        %s189 = scalar_select %p188, %s22, 0
        %s190 = smul.addr %s189, 3
        %s191 = smul.addr %s187, 3
        %s192 = sadd.s32 %s190, %s191
        %s193 = scalar_lea.vmem %s0, %s192
        %s194 = smul.u32 2, %s22
        %v195 = vld [vmem:[%s193] sm:$0x7]
        %v196 = vlaneseq
        %v197 = vand.u32 %v196, 127
        %v198 = vadd.s32 %v197, 128
        %s199 = smul.u32 %s22, 256
        %v200 = vstv %s199
        %v201 = vadd.s32 %v200, %v197
        %v202 = vadd.s32 %v200, %v198
        %v203 = vand.u32 %v201, 15
        %v204 = vand.u32 %v202, 15
        %vm205 = vcmp.ne.s32.totalorder %v203, 0
        %vm206 = vcmp.ne.s32.totalorder %v204, 0
        %vm207 = vcmp.ne.s32.totalorder %v203, 15
        %vm208 = vcmp.ne.s32.totalorder %v204, 15
        %v210 = vperm.slane %v195, 0
        %v211 = vperm.slane %v195, 1
        %v214 = vsel %vm205, %v210, 0.0
        %v215 = vsel %vm206, %v211, 0.0
        %v218 = vrot.slane %v215, 7
        %vm219 = vcmask 1040384
        %v220 = vsel %vm219, %v214, %v218
        %v222 = vlaneseq
        %vm223 = vcmp.ge.s32.totalorder %v222, 0
        %vm224 = vcmp.lt.s32.totalorder %v222, 256
        %vm225 = vmand %vm223, %vm224
        %226 = vst.msk [vmem:[#allocation2] ss:$8 sm:$0x3] %vm225, %v220
        %227 = vst.msk [vmem:[#allocation2] ss:$8 sm:$0x0] %vm225, %v220
        %v228 = vperm.slane %v195, 2
        %230 = vrot.lane.b32.xlu0 %v210, 127
        %v231 = vpop.permute.xlu0 %230
        %232 = vrot.lane.b32.xlu0 %v211, 127
        %v233 = vpop.permute.xlu0 %232
        %234 = vrot.lane.b32.xlu0 %v228, 127
        %v235 = vpop.permute.xlu0 %234
        %vm236 = vcmp.lt.s32.totalorder %v197, 127
        %v237 = vsel %vm236, %v233, %v235
        %v238 = vsel %vm236, %v231, %v233
        %v241 = vrot.slane %v237, 7
        %v242 = vsel %vm219, %v238, %v241
        %s244 = scalar_lea.vmem [#allocation2], 1
        %245 = vst.msk [vmem:[%s244] ss:$8 sm:$0x3] %vm225, %v242
        %246 = vst.msk [vmem:[%s244] ss:$8 sm:$0x0] %vm225, %v242
        %247 = vrot.lane.b32.xlu0 %v210, 126
        %v248 = vpop.permute.xlu0 %247
        %249 = vrot.lane.b32.xlu0 %v211, 126
        %v250 = vpop.permute.xlu0 %249
        %251 = vrot.lane.b32.xlu0 %v228, 126
        %v252 = vpop.permute.xlu0 %251
        %vm253 = vcmp.lt.s32.totalorder %v197, 126
        %v254 = vsel %vm253, %v250, %v252
        %v255 = vsel %vm253, %v248, %v250
        %v256 = vsel %vm207, %v255, 0.0
        %v257 = vsel %vm208, %v254, 0.0
        %v260 = vrot.slane %v257, 7
        %v261 = vsel %vm219, %v256, %v260
        %s263 = scalar_lea.vmem [#allocation2], 2
        %264 = vst.msk [vmem:[%s263] ss:$8 sm:$0x3] %vm225, %v261
        %265 = vst.msk [vmem:[%s263] ss:$8 sm:$0x0] %vm225, %v261
        %266 = vrot.lane.b32.xlu0 %v210, 112
        %v267 = vpop.permute.xlu0 %266
        %268 = vrot.lane.b32.xlu0 %v211, 112
        %v269 = vpop.permute.xlu0 %268
        %270 = vrot.lane.b32.xlu0 %v228, 112
        %v271 = vpop.permute.xlu0 %270
        %vm272 = vcmp.lt.s32.totalorder %v197, 112
        %v273 = vsel %vm272, %v269, %v271
        %v274 = vsel %vm272, %v267, %v269
        %v275 = vsel %vm205, %v274, 0.0
        %v276 = vsel %vm206, %v273, 0.0
        %v279 = vrot.slane %v276, 7
        %v280 = vsel %vm219, %v275, %v279
        %s282 = scalar_lea.vmem [#allocation2], 3
        %283 = vst.msk [vmem:[%s282] ss:$8 sm:$0x3] %vm225, %v280
        %284 = vst.msk [vmem:[%s282] ss:$8 sm:$0x0] %vm225, %v280
        %285 = vrot.lane.b32.xlu0 %v210, 111
        %v286 = vpop.permute.xlu0 %285
        %287 = vrot.lane.b32.xlu0 %v211, 111
        %v288 = vpop.permute.xlu0 %287
        %289 = vrot.lane.b32.xlu0 %v228, 111
        %v290 = vpop.permute.xlu0 %289
        %vm291 = vcmp.lt.s32.totalorder %v197, 111
        %v292 = vsel %vm291, %v288, %v290
        %v293 = vsel %vm291, %v286, %v288
        %v296 = vrot.slane %v292, 7
        %v297 = vsel %vm219, %v293, %v296
        %s299 = scalar_lea.vmem [#allocation2], 4
        %300 = vst.msk [vmem:[%s299] ss:$8 sm:$0x3] %vm225, %v297
        %301 = vst.msk [vmem:[%s299] ss:$8 sm:$0x0] %vm225, %v297
        %302 = vrot.lane.b32.xlu0 %v210, 110
        %v303 = vpop.permute.xlu0 %302
        %304 = vrot.lane.b32.xlu0 %v211, 110
        %v305 = vpop.permute.xlu0 %304
        %306 = vrot.lane.b32.xlu0 %v228, 110
        %v307 = vpop.permute.xlu0 %306
        %vm308 = vcmp.lt.s32.totalorder %v197, 110
        %v309 = vsel %vm308, %v305, %v307
        %v310 = vsel %vm308, %v303, %v305
        %v311 = vsel %vm207, %v310, 0.0
        %v312 = vsel %vm208, %v309, 0.0
        %v315 = vrot.slane %v312, 7
        %v316 = vsel %vm219, %v311, %v315
        %s318 = scalar_lea.vmem [#allocation2], 5
        %319 = vst.msk [vmem:[%s318] ss:$8 sm:$0x3] %vm225, %v316
        %320 = vst.msk [vmem:[%s318] ss:$8 sm:$0x0] %vm225, %v316
        %321 = vrot.lane.b32.xlu0 %v210, 96
        %v322 = vpop.permute.xlu0 %321
        %323 = vrot.lane.b32.xlu0 %v211, 96
        %v324 = vpop.permute.xlu0 %323
        %325 = vrot.lane.b32.xlu0 %v228, 96
        %v326 = vpop.permute.xlu0 %325
        %vm327 = vcmp.lt.s32.totalorder %v197, 96
        %v328 = vsel %vm327, %v324, %v326
        %v329 = vsel %vm327, %v322, %v324
        %v330 = vsel %vm205, %v329, 0.0
        %v331 = vsel %vm206, %v328, 0.0
        %v334 = vrot.slane %v331, 7
        %v335 = vsel %vm219, %v330, %v334
        %s337 = scalar_lea.vmem [#allocation2], 6
        %338 = vst.msk [vmem:[%s337] ss:$8 sm:$0x3] %vm225, %v335
        %339 = vst.msk [vmem:[%s337] ss:$8 sm:$0x0] %vm225, %v335
        %340 = vrot.lane.b32.xlu0 %v210, 95
        %v341 = vpop.permute.xlu0 %340
        %342 = vrot.lane.b32.xlu0 %v211, 95
        %v343 = vpop.permute.xlu0 %342
        %344 = vrot.lane.b32.xlu0 %v228, 95
        %v345 = vpop.permute.xlu0 %344
        %vm346 = vcmp.lt.s32.totalorder %v197, 95
        %v347 = vsel %vm346, %v343, %v345
        %v348 = vsel %vm346, %v341, %v343
        %v351 = vrot.slane %v347, 7
        %v352 = vsel %vm219, %v348, %v351
        %s354 = scalar_lea.vmem [#allocation2], 7
        %355 = vst.msk [vmem:[%s354] ss:$8 sm:$0x3] %vm225, %v352
        %356 = vst.msk [vmem:[%s354] ss:$8 sm:$0x0] %vm225, %v352
        %357 = vrot.lane.b32.xlu0 %v210, 94
        %v358 = vpop.permute.xlu0 %357
        %359 = vrot.lane.b32.xlu0 %v211, 94
        %v360 = vpop.permute.xlu0 %359
        %361 = vrot.lane.b32.xlu0 %v228, 94
        %v362 = vpop.permute.xlu0 %361
        %vm363 = vcmp.lt.s32.totalorder %v197, 94
        %v364 = vsel %vm363, %v360, %v362
        %v365 = vsel %vm363, %v358, %v360
        %v366 = vsel %vm207, %v365, 0.0
        %v367 = vsel %vm208, %v364, 0.0
        %v370 = vrot.slane %v367, 7
        %v371 = vsel %vm219, %v366, %v370
        %s373 = scalar_lea.vmem [#allocation2], 16
        %374 = vst.msk [vmem:[%s373] ss:$8 sm:$0x3] %vm225, %v371
        %375 = vst.msk [vmem:[%s373] ss:$8 sm:$0x0] %vm225, %v371
        %v376 = vld [vmem:[%s1] sm:$0xff]
        %v377 = vld [vmem:[%s1 + $0x8] sm:$0xff]
        %v378 = vld [vmem:[%s1 + $0x10] sm:$0xff]
        %v379 = vld [vmem:[%s1 + $0x18] sm:$0xff]
        %v380 = vld [vmem:[%s1 + $0x20] sm:$0xff]
        %v381 = vld [vmem:[%s1 + $0x28] sm:$0xff]
        %v382 = vld [vmem:[%s1 + $0x30] sm:$0xff]
        %v383 = vld [vmem:[%s1 + $0x38] sm:$0xff]
        %v384 = vld [vmem:[%s1 + $0x40] sm:$0xff]
        %v385 = vld [vmem:[%s1 + $0x48] sm:$0xff]
        %v386 = vld [vmem:[%s1 + $0x50] sm:$0xff]
        %v387 = vld [vmem:[%s1 + $0x58] sm:$0xff]
        %v388 = vld [vmem:[%s1 + $0x60] sm:$0xff]
        %v389 = vld [vmem:[%s1 + $0x68] sm:$0xff]
        %v390 = vld [vmem:[%s1 + $0x70] sm:$0xff]
        %v391 = vld [vmem:[%s1 + $0x78] sm:$0xff]
        %v392 = vld [vmem:[#allocation2] sm:$0xff]
        %v393 = vld [vmem:[#allocation2 + $0x8] sm:$0xff]
        %v394 = vld [vmem:[#allocation2 + $0x10] sm:$0x1]
        %v395 = vld [vmem:[#allocation2 + $0x18] sm:$0x1]
        %v396 = vld [vmem:[%s2] sm:$0xff]
        %v397 = vld [vmem:[%s2 + $0x8] sm:$0xff]
        %v398 = vld [vmem:[%s2 + $0x10] sm:$0xff]
        %v399 = vld [vmem:[%s2 + $0x18] sm:$0xff]
        %v400 = vld [vmem:[%s2 + $0x20] sm:$0xff]
        %v401 = vld [vmem:[%s2 + $0x28] sm:$0xff]
        %v402 = vld [vmem:[%s2 + $0x30] sm:$0xff]
        %v403 = vld [vmem:[%s2 + $0x38] sm:$0xff]
        %v404 = vld [vmem:[%s2 + $0x40] sm:$0xff]
        %v405 = vld [vmem:[%s2 + $0x48] sm:$0xff]
        %v406 = vld [vmem:[%s2 + $0x50] sm:$0xff]
        %v407 = vld [vmem:[%s2 + $0x58] sm:$0xff]
        %v408 = vld [vmem:[%s2 + $0x60] sm:$0xff]
        %v409 = vld [vmem:[%s2 + $0x68] sm:$0xff]
        %v410 = vld [vmem:[%s2 + $0x70] sm:$0xff]
        %v411 = vld [vmem:[%s2 + $0x78] sm:$0xff]
        %413 = vset.pattern.permute.xlu0 0
        %414 = vperm.xlu0 %413, %v396
        %v415 = vpop.permute.xlu0 %414
        %418 = vset.pattern.permute.xlu0 0
        %419 = vperm.xlu0 %418, %v397
        %v420 = vpop.permute.xlu0 %419
        %423 = vset.pattern.permute.xlu0 0
        %424 = vperm.xlu0 %423, %v398
        %v425 = vpop.permute.xlu0 %424
        %428 = vset.pattern.permute.xlu0 0
        %429 = vperm.xlu0 %428, %v399
        %v430 = vpop.permute.xlu0 %429
        %433 = vset.pattern.permute.xlu0 0
        %434 = vperm.xlu0 %433, %v400
        %v435 = vpop.permute.xlu0 %434
        %438 = vset.pattern.permute.xlu0 0
        %439 = vperm.xlu0 %438, %v401
        %v440 = vpop.permute.xlu0 %439
        %443 = vset.pattern.permute.xlu0 0
        %444 = vperm.xlu0 %443, %v402
        %v445 = vpop.permute.xlu0 %444
        %448 = vset.pattern.permute.xlu0 0
        %449 = vperm.xlu0 %448, %v403
        %v450 = vpop.permute.xlu0 %449
        %453 = vset.pattern.permute.xlu0 0
        %454 = vperm.xlu0 %453, %v404
        %v455 = vpop.permute.xlu0 %454
        %458 = vset.pattern.permute.xlu0 0
        %459 = vperm.xlu0 %458, %v405
        %v460 = vpop.permute.xlu0 %459
        %463 = vset.pattern.permute.xlu0 0
        %464 = vperm.xlu0 %463, %v406
        %v465 = vpop.permute.xlu0 %464
        %468 = vset.pattern.permute.xlu0 0
        %469 = vperm.xlu0 %468, %v407
        %v470 = vpop.permute.xlu0 %469
        %473 = vset.pattern.permute.xlu0 0
        %474 = vperm.xlu0 %473, %v408
        %v475 = vpop.permute.xlu0 %474
        %478 = vset.pattern.permute.xlu0 0
        %479 = vperm.xlu0 %478, %v409
        %v480 = vpop.permute.xlu0 %479
        %483 = vset.pattern.permute.xlu0 0
        %484 = vperm.xlu0 %483, %v410
        %v485 = vpop.permute.xlu0 %484
        %488 = vset.pattern.permute.xlu0 0
        %489 = vperm.xlu0 %488, %v411
        %v490 = vpop.permute.xlu0 %489
        %vm492 = vcmask 72704
        %v494 = vsel %vm492, %v376, 0
        %v497 = vsel %vm492, %v377, 0
        %v500 = vsel %vm492, %v378, 0
        %v503 = vsel %vm492, %v379, 0
        %v506 = vsel %vm492, %v380, 0
        %v509 = vsel %vm492, %v381, 0
        %v512 = vsel %vm492, %v382, 0
        %v515 = vsel %vm492, %v383, 0
        %v518 = vsel %vm492, %v384, 0
        %v521 = vsel %vm492, %v385, 0
        %v524 = vsel %vm492, %v386, 0
        %v527 = vsel %vm492, %v387, 0
        %v530 = vsel %vm492, %v388, 0
        %v533 = vsel %vm492, %v389, 0
        %v536 = vsel %vm492, %v390, 0
        %v539 = vsel %vm492, %v391, 0
        %v542 = vsel %vm219, %v394, 0
        %v545 = vsel %vm219, %v395, 0
        %547 = vmatpush.msra.mxu0 0.0
        %548 = vmatpush.msra.mxu0 0.0
        %549 = vmatpush.msra.mxu0 0.0
        %550 = vmatpush.msra.mxu0 0.0
        %551 = vmatpush.msra.mxu0 0.0
        %552 = vmatpush.msra.mxu0 0.0
        %553 = vmatpush.msra.mxu0 0.0
        %554 = vmatpush.msra.mxu0 0.0
        %555 = vmatpush.msra.mxu0 0.0
        %556 = vmatpush.msra.mxu0 0.0
        %557 = vmatpush.msra.mxu0 0.0
        %558 = vmatpush.msra.mxu0 0.0
        %559 = vmatpush.msra.mxu0 0.0
        %560 = vmatpush.msra.mxu0 0.0
        %561 = vmatpush.msra.mxu0 %v542
        %562 = vmatpush.msra.mxu0 %v392
        %563 = vmatmul.f32.gmra.mxu0 %v494
        %v564 = vpop.f32.mrf.mxu0
        %v565 = vadd.f32 %v415, %v564
        %566 = vmatmul.f32.gmra.mxu0 %v497
        %v567 = vpop.f32.mrf.mxu0
        %v568 = vadd.f32 %v420, %v567
        %569 = vmatmul.f32.gmra.mxu0 %v500
        %v570 = vpop.f32.mrf.mxu0
        %v571 = vadd.f32 %v425, %v570
        %572 = vmatmul.f32.gmra.mxu0 %v503
        %v573 = vpop.f32.mrf.mxu0
        %v574 = vadd.f32 %v430, %v573
        %575 = vmatmul.f32.gmra.mxu0 %v506
        %v576 = vpop.f32.mrf.mxu0
        %v577 = vadd.f32 %v435, %v576
        %578 = vmatmul.f32.gmra.mxu0 %v509
        %v579 = vpop.f32.mrf.mxu0
        %v580 = vadd.f32 %v440, %v579
        %581 = vmatmul.f32.gmra.mxu0 %v512
        %v582 = vpop.f32.mrf.mxu0
        %v583 = vadd.f32 %v445, %v582
        %584 = vmatmul.f32.gmra.mxu0 %v515
        %v585 = vpop.f32.mrf.mxu0
        %v586 = vadd.f32 %v450, %v585
        %587 = vmatmul.f32.gmra.mxu0 %v518
        %v588 = vpop.f32.mrf.mxu0
        %v589 = vadd.f32 %v455, %v588
        %590 = vmatmul.f32.gmra.mxu0 %v521
        %v591 = vpop.f32.mrf.mxu0
        %v592 = vadd.f32 %v460, %v591
        %593 = vmatmul.f32.gmra.mxu0 %v524
        %v594 = vpop.f32.mrf.mxu0
        %v595 = vadd.f32 %v465, %v594
        %596 = vmatmul.f32.gmra.mxu0 %v527
        %v597 = vpop.f32.mrf.mxu0
        %v598 = vadd.f32 %v470, %v597
        %599 = vmatmul.f32.gmra.mxu0 %v530
        %v600 = vpop.f32.mrf.mxu0
        %v601 = vadd.f32 %v475, %v600
        %602 = vmatmul.f32.gmra.mxu0 %v533
        %v603 = vpop.f32.mrf.mxu0
        %v604 = vadd.f32 %v480, %v603
        %605 = vmatmul.f32.gmra.mxu0 %v536
        %v606 = vpop.f32.mrf.mxu0
        %v607 = vadd.f32 %v485, %v606
        %608 = vmatmul.f32.gmra.mxu0 %v539
        %v609 = vpop.f32.mrf.mxu0
        %v610 = vadd.f32 %v490, %v609
        %611 = vdwg.mxu0
        %612 = vmatpush.msra.mxu0 0.0
        %613 = vmatpush.msra.mxu0 0.0
        %614 = vmatpush.msra.mxu0 0.0
        %615 = vmatpush.msra.mxu0 0.0
        %616 = vmatpush.msra.mxu0 0.0
        %617 = vmatpush.msra.mxu0 0.0
        %618 = vmatpush.msra.mxu0 0.0
        %619 = vmatpush.msra.mxu0 0.0
        %620 = vmatpush.msra.mxu0 0.0
        %621 = vmatpush.msra.mxu0 0.0
        %622 = vmatpush.msra.mxu0 0.0
        %623 = vmatpush.msra.mxu0 0.0
        %624 = vmatpush.msra.mxu0 0.0
        %625 = vmatpush.msra.mxu0 0.0
        %626 = vmatpush.msra.mxu0 %v545
        %627 = vmatpush.msra.mxu0 %v393
        %628 = vmatmul.f32.gmra.mxu0 %v494
        %v629 = vpop.f32.mrf.mxu0
        %v630 = vadd.f32 %v415, %v629
        %631 = vmatmul.f32.gmra.mxu0 %v497
        %v632 = vpop.f32.mrf.mxu0
        %v633 = vadd.f32 %v420, %v632
        %634 = vmatmul.f32.gmra.mxu0 %v500
        %v635 = vpop.f32.mrf.mxu0
        %v636 = vadd.f32 %v425, %v635
        %637 = vmatmul.f32.gmra.mxu0 %v503
        %v638 = vpop.f32.mrf.mxu0
        %v639 = vadd.f32 %v430, %v638
        %640 = vmatmul.f32.gmra.mxu0 %v506
        %v641 = vpop.f32.mrf.mxu0
        %v642 = vadd.f32 %v435, %v641
        %643 = vmatmul.f32.gmra.mxu0 %v509
        %v644 = vpop.f32.mrf.mxu0
        %v645 = vadd.f32 %v440, %v644
        %646 = vmatmul.f32.gmra.mxu0 %v512
        %v647 = vpop.f32.mrf.mxu0
        %v648 = vadd.f32 %v445, %v647
        %649 = vmatmul.f32.gmra.mxu0 %v515
        %v650 = vpop.f32.mrf.mxu0
        %v651 = vadd.f32 %v450, %v650
        %652 = vmatmul.f32.gmra.mxu0 %v518
        %v653 = vpop.f32.mrf.mxu0
        %v654 = vadd.f32 %v455, %v653
        %655 = vmatmul.f32.gmra.mxu0 %v521
        %v656 = vpop.f32.mrf.mxu0
        %v657 = vadd.f32 %v460, %v656
        %658 = vmatmul.f32.gmra.mxu0 %v524
        %v659 = vpop.f32.mrf.mxu0
        %v660 = vadd.f32 %v465, %v659
        %661 = vmatmul.f32.gmra.mxu0 %v527
        %v662 = vpop.f32.mrf.mxu0
        %v663 = vadd.f32 %v470, %v662
        %664 = vmatmul.f32.gmra.mxu0 %v530
        %v665 = vpop.f32.mrf.mxu0
        %v666 = vadd.f32 %v475, %v665
        %667 = vmatmul.f32.gmra.mxu0 %v533
        %v668 = vpop.f32.mrf.mxu0
        %v669 = vadd.f32 %v480, %v668
        %670 = vmatmul.f32.gmra.mxu0 %v536
        %v671 = vpop.f32.mrf.mxu0
        %v672 = vadd.f32 %v485, %v671
        %673 = vmatmul.f32.gmra.mxu0 %v539
        %v674 = vpop.f32.mrf.mxu0
        %v675 = vadd.f32 %v490, %v674
        %676 = vdwg.mxu0
        %677 = vst [vmem:[%s185] sm:$0xff] %v565
        %678 = vst [vmem:[%s185 + $0x8] sm:$0xff] %v630
        %679 = vst [vmem:[%s185 + $0x10] sm:$0xff] %v568
        %680 = vst [vmem:[%s185 + $0x18] sm:$0xff] %v633
        %681 = vst [vmem:[%s185 + $0x20] sm:$0xff] %v571
        %682 = vst [vmem:[%s185 + $0x28] sm:$0xff] %v636
        %683 = vst [vmem:[%s185 + $0x30] sm:$0xff] %v574
        %684 = vst [vmem:[%s185 + $0x38] sm:$0xff] %v639
        %685 = vst [vmem:[%s185 + $0x40] sm:$0xff] %v577
        %686 = vst [vmem:[%s185 + $0x48] sm:$0xff] %v642
        %687 = vst [vmem:[%s185 + $0x50] sm:$0xff] %v580
        %688 = vst [vmem:[%s185 + $0x58] sm:$0xff] %v645
        %689 = vst [vmem:[%s185 + $0x60] sm:$0xff] %v583
        %690 = vst [vmem:[%s185 + $0x68] sm:$0xff] %v648
        %691 = vst [vmem:[%s185 + $0x70] sm:$0xff] %v586
        %692 = vst [vmem:[%s185 + $0x78] sm:$0xff] %v651
        %693 = vst [vmem:[%s185 + $0x80] sm:$0xff] %v589
        %694 = vst [vmem:[%s185 + $0x88] sm:$0xff] %v654
        %695 = vst [vmem:[%s185 + $0x90] sm:$0xff] %v592
        %696 = vst [vmem:[%s185 + $0x98] sm:$0xff] %v657
        %697 = vst [vmem:[%s185 + $0xa0] sm:$0xff] %v595
        %698 = vst [vmem:[%s185 + $0xa8] sm:$0xff] %v660
        %699 = vst [vmem:[%s185 + $0xb0] sm:$0xff] %v598
        %700 = vst [vmem:[%s185 + $0xb8] sm:$0xff] %v663
        %701 = vst [vmem:[%s185 + $0xc0] sm:$0xff] %v601
        %702 = vst [vmem:[%s185 + $0xc8] sm:$0xff] %v666
        %703 = vst [vmem:[%s185 + $0xd0] sm:$0xff] %v604
        %704 = vst [vmem:[%s185 + $0xd8] sm:$0xff] %v669
        %705 = vst [vmem:[%s185 + $0xe0] sm:$0xff] %v607
        %706 = vst [vmem:[%s185 + $0xe8] sm:$0xff] %v672
        %707 = vst [vmem:[%s185 + $0xf0] sm:$0xff] %v610
        %708 = vst [vmem:[%s185 + $0xf8] sm:$0xff] %v675
        %s709 = sand.u32 %s109, 1
        %s710 = scalar_lea.sflag [#allocation4], %s709
        %s711 = sand.u32 %s109, 1
        %s712 = smul.addr %s711, 256
        %s713 = scalar_lea.vmem [#allocation3], %s712
        // Predicated region
        $region33: #{tpu_custom_call.1} parent=31 // pred_check
          %p714 = pneg %p119
        $region34: #{tpu_custom_call.1} parent=31 // pred_check_branch
          %716 = sbr.rel (%p714) target = $region36
        $region35: #{tpu_custom_call.1} parent=31 // pred_region
          %s717 = smul.u32 2, %s22
          %719 = vsyncadd %s710, 0
          %s720 = smul.addr %s21, 32
          %s721 = sadd.s32 %s717, %s720
          %s722 = smul.addr %s721, 8
          %s723 = scalar_lea.hbm %s3, %s722
          %s724 = sshll.u32 %s713, 4
          %s725 = int_to_ptr.vmem [resolvable:$true] %s724
          %s726 = sshll.u32 %s723, 4
          %s727 = int_to_ptr.hbm [resolvable:$true] %s726
          %732 = dma.vmem_to_hbm [thread:$0]  %s725, 4096, %s727, %s710, 256, 256, 16
        $region36: #{tpu_custom_call.1} parent=31 // pred_fallthru
          _
      $region32: #{tpu_custom_call.1} parent=5 // pred_fallthru
        _
      %p733 = scmp.le.s32.totalorder 2, %s12
      // Predicated region
      $region37: #{tpu_custom_call.1} parent=5 // pred_check
        %p734 = pneg %p733
      $region38: #{tpu_custom_call.1} parent=5 // pred_check_branch
        %736 = sbr.rel (%p734) target = $region40
      $region39: #{tpu_custom_call.1} parent=5 // pred_region
        %s737 = ssub.s32 %s12, 2
        // Predicated region
        $region41: #{tpu_custom_call.1} parent=39 // pred_check
          %p738 = pneg %p125
        $region42: #{tpu_custom_call.1} parent=39 // pred_check_branch
          %740 = sbr.rel (%p738) target = $region44
        $region43: #{tpu_custom_call.1} parent=39 // pred_region
          %s741 = sand.u32 %s110, 1
          %s742 = scalar_lea.sflag [#allocation4], %s741
          %s743 = sand.u32 %s110, 1
          %s744 = smul.addr %s743, 256
          %s745 = scalar_lea.vmem [#allocation3], %s744
          %747 = dma.done %s742, 4096
        $region44: #{tpu_custom_call.1} parent=39 // pred_fallthru
          _
      $region40: #{tpu_custom_call.1} parent=5 // pred_fallthru
        _
    $region6: #{tpu_custom_call.1} parent=1 // loop_footer
      %s16 = sadd.s32 1, %s12
    $region7: #{tpu_custom_call.1} parent=1 // loop_footer_branch
      %11 = sbr.rel target = $region3
    $region8: #{tpu_custom_call.1} parent=1 // loop_exit
      _
    %748 = vsyncpa [#allocation4], 1
    %s749 = scalar_lea.sflag [#allocation4], 1
    %750 = vsyncpa %s749, 1

</llo_original>
